<compile_context>
chip_gen: v5e
topology: v5e:2x2
jax: 0.10.0
libtpu: 0.0.40
codegen_flags: <defaults>
</compile_context>

<pallas_src>
import functools

import jax
import jax.numpy as jnp
import numpy as np
from jax.experimental import pallas as pl
from jax.experimental.pallas import tpu as pltpu


def top_down_verb_kernel(
    v_ref,       # (Bb, Cin+1, HW)  raw image channels + ones channel; HW on lanes
    wr_ref,      # (Kr, Nr)         RHS-oriented weights, 128-lane-aligned columns
    wl_ref,      # (Kl, Nl)         LHS-oriented (attention) weights, 128-lane-aligned columns
    brow_ref,    # (1, Nb)          row biases, 128-lane-aligned columns
    o_ref,       # (Bb, NV)
    *, sizes, r_off, l_off, b_off,
):
    f32 = jnp.float32
    HID, NL, A, Cin1 = sizes["HID"], sizes["NL"], sizes["A"], sizes["Cin1"]
    Bb = v_ref.shape[0]
    HW = v_ref.shape[2]

    def W(name):                       # RHS weight slice (k, n)  -- static, lane-aligned
        off, k, n = r_off[name]
        return wr_ref[0:k, off:off + n]

    def Wl(name):                      # LHS (pre-transposed) weight slice (k, n)
        off, k, n = l_off[name]
        return wl_ref[0:k, off:off + n]

    def Brow(name):                    # (1, n) bias row
        off, n = b_off[name]
        return brow_ref[0:1, off:off + n]

    def mm(a, b):
        return jnp.dot(a, b, preferred_element_type=f32)

    relu = lambda x: jnp.maximum(x, 0.0)

    v = v_ref[...]                                            # (Bb, Cin+1, HW)

    # ---- role_module.forward_agentplace_noverb on the spatially pooled input.
    # The ones channel pools to exactly 1.0, so folded bias rows apply through the matmul.
    pooled = jnp.mean(v, axis=-1)                             # (Bb, Cin+1)  lane reduction
    rep_ap = relu(mm(pooled, W("wr_ap")))                     # (Bb, 2*HID)  fused agent|place
    rep_a, rep_p = rep_ap[:, :HID], rep_ap[:, HID:]
    role_rep_combo = rep_a + rep_p                            # torch.sum(agent_place_rep, 1)

    # ---- label predictions: single block-diagonal matmul, per-half first-argmax via masks
    pred_ap = mm(rep_ap, W("wc_ap")) + Brow("bc_ap")          # (Bb, 2*NL) = [pred_a | pred_p]
    iota2 = jax.lax.broadcasted_iota(jnp.int32, (Bb, 2 * NL), 1)
    in_a = iota2 < NL
    neg = jnp.full_like(pred_ap, jnp.finfo(jnp.float32).min)
    max_a = jnp.max(jnp.where(in_a, pred_ap, neg), axis=-1, keepdims=True)
    max_p = jnp.max(jnp.where(in_a, neg, pred_ap), axis=-1, keepdims=True)
    # first-argmax tie-break (matches torch.max / jnp.argmax); idx_p is the full 2*NL index
    idx_a = jnp.min(jnp.where(in_a & (pred_ap == max_a), iota2, 2 * NL),
                    axis=-1, keepdims=True)
    idx_p = jnp.min(jnp.where((~in_a) & (pred_ap == max_p), iota2, 2 * NL),
                    axis=-1, keepdims=True)
    onehot2 = ((iota2 == idx_a) | (iota2 == idx_p)).astype(f32)          # (Bb, 2*NL)

    # ---- query composition (label_emb @ query_composer folded on host) + fused q-branch
    q_emb = mm(onehot2, W("emb_wqc")) + Brow("bqc")           # (Bb, Q); Dropout_C = id (eval)
    q_fused = relu(mm(q_emb, W("wqa_qn")) + Brow("bqa_qn"))   # (Bb, A + HID)
    q_proj, q_repr = q_fused[:, :A], q_fused[:, A:]

    # ---- ext_ctx: avg_pool(conv1x1(v)) @ resize == pooled @ (wconv @ wres)  (biases folded)
    img_feat_flat = mm(pooled, W("wconv_res"))                # (Bb, HID)
    ext_ctx = img_feat_flat * role_rep_combo                  # (Bb, HID)

    # ---- spatial attention branch (features on sublanes, HW on lanes)
    # conv1x1 + v_att image projection folded on host into wva_conv (A, Cin+1);
    # q_proj folded into the attention row:  watt.T @ (P * q) == (watt.T * q) @ P.
    wva_conv = Wl("wva_conv")                                 # (A, Cin+1)
    wattT = Wl("wattT")                                       # (1, A)
    batt_row = jnp.broadcast_to(Brow("batt"), (1, HW))        # hoisted broadcast (not CSE'd)
    weighted_rows = []
    for b in range(Bb):                                       # Bb small; per-iter state tiny
        vb = v[b]                                             # (Cin+1, HW)
        p_att = relu(mm(wva_conv, vb))                        # (A, HW)  bias via ones channel
        wq = wattT * q_proj[b:b + 1, :]                       # (1, A)
        logits = mm(wq, p_att) + batt_row                     # (1, HW)
        aexp = jnp.exp(logits - jnp.max(logits, axis=-1, keepdims=True))
        # unnormalized attention-weighted spatial sum as an MXU contraction over HW;
        # the ones channel yields the softmax denominator in the last column for free.
        weighted_rows.append(jax.lax.dot_general(
            aexp, vb, (((1,), (1,)), ((), ())), preferred_element_type=f32))   # (1, Cin+1)
    weighted = jnp.concatenate(weighted_rows, axis=0)         # (Bb, Cin+1)
    z = weighted[:, Cin1 - 1:Cin1]                            # (Bb, 1) softmax denominators
    # exact normalization -> ones column becomes exactly 1, so bconv (last row of wconv_aug)
    # is applied with weight 1; conv1x1 applied once after the weighted sum.
    v_emb = mm(weighted / z, W("wconv_aug"))                  # (Bb, C)

    # ---- v_net / fusion / classifier
    v_repr = relu(mm(v_emb, W("wvn")) + Brow("bvn"))          # (Bb, HID)
    out = q_repr * v_repr + ext_ctx                           # (Bb, HID)
    h = relu(mm(out, W("wc1")) + Brow("bc1"))                 # (Bb, CH)
    o_ref[...] = mm(h, W("wc2")) + Brow("bc2")                # (Bb, NV) single lane-dense store


# -------------------- packing helpers (host side) --------------------

_LANE = 128


def _pack_weight_slab(entries):
    """Pad each (k_i, n_i) weight to the max row count and a 128-lane-aligned column slot,
    then concat along columns.  Offsets are lane-tile aligned so kernel slices are free views.
    Returns (slab, {name: (col_offset, k_i, n_i)})."""
    kmax = max(int(a.shape[0]) for _, a in entries)
    cols, offs, off = [], {}, 0
    for name, a in entries:
        a = jnp.asarray(a, jnp.float32)
        k, n = int(a.shape[0]), int(a.shape[1])
        n_pad = ((n + _LANE - 1) // _LANE) * _LANE
        cols.append(jnp.pad(a, ((0, kmax - k), (0, n_pad - n))))
        offs[name] = (off, k, n)
        off += n_pad
    return jnp.concatenate(cols, axis=1), offs


def _pack_bias_row(entries):
    rows, offs, off = [], {}, 0
    for name, a in entries:
        a = jnp.asarray(a, jnp.float32).reshape(1, -1)
        n = int(a.shape[1])
        n_pad = ((n + _LANE - 1) // _LANE) * _LANE
        rows.append(jnp.pad(a, ((0, 0), (0, n_pad - n))))
        offs[name] = (off, n)
        off += n_pad
    return jnp.concatenate(rows, axis=1), offs


def _hdot(a, b):
    # Host-side weight folds must be full f32 precision (default TPU dot is bf16-based).
    return jnp.dot(a, b, precision=jax.lax.Precision.HIGHEST)


# -------------------- wrapper --------------------

def top_down_verb_forward(x_nchw, params, batch_block=None):
    """Fused forward pass.  batch_block = images per grid step; default = whole batch in one
    step.  Only split the grid (e.g. for the two v7x TensorCores) once the per-step batch is
    >= 8 rows — at small B a split just duplicates the weight-slab DMA and per-step overhead."""
    B, Cin, H, W = x_nchw.shape
    HW = H * W
    f32 = jnp.float32
    v = x_nchw.reshape(B, Cin, HW).astype(f32)
    # ones channel carries every folded column bias (and the softmax denominator) through
    # the attention-branch matmuls; also makes pooled[:, -1] == 1.0 exactly (HW*1/HW).
    v_aug = jnp.concatenate([v, jnp.ones((B, 1, HW), f32)], axis=1)   # (B, Cin+1, HW)

    HID = int(params["wr_a"].shape[1])
    NL = int(params["wc_a"].shape[1])
    C = int(params["wconv"].shape[1])
    A = int(params["wva"].shape[1])
    NV = int(params["wc2"].shape[1])

    # ---- host-side folds (all at HIGHEST precision) ----
    # role heads with biases folded onto the ones channel
    wr_ap = jnp.concatenate([
        jnp.concatenate([params["wr_a"], params["wr_p"]], axis=1),
        jnp.concatenate([params["br_a"], params["br_p"]], axis=1)], axis=0)    # (Cin+1, 2H)

    zHL = jnp.zeros((HID, NL), f32)
    wc_ap = jnp.concatenate([
        jnp.concatenate([params["wc_a"], zHL], axis=1),
        jnp.concatenate([zHL, params["wc_p"]], axis=1)], axis=0)               # (2H, 2NL)
    bc_ap = jnp.concatenate([params["bc_a"], params["bc_p"]], axis=1)

    emb = params["emb"]
    zE = jnp.zeros_like(emb)
    emb_blkdiag = jnp.concatenate([
        jnp.concatenate([emb, zE], axis=1),
        jnp.concatenate([zE, emb], axis=1)], axis=0)                            # (2NL, 2E)
    emb_wqc = _hdot(emb_blkdiag, params["wqc"])                                 # (2NL, Q)

    wqa_qn = jnp.concatenate([params["wqa"], params["wqn"]], axis=1)            # (Q, A+H)
    bqa_qn = jnp.concatenate([params["bqa"], params["bqn"]], axis=1)

    # ext_ctx path: mean(conv1x1(v)) @ wres + bres == pooled @ (wconv@wres) (+ folded bias row)
    wconv_res = jnp.concatenate([
        _hdot(params["wconv"], params["wres"]),
        _hdot(params["bconv"], params["wres"]) + params["bres"]], axis=0)       # (Cin+1, H)

    # attention-weighted-sum path: conv applied after the weighted sum; bconv as last row
    wconv_aug = jnp.concatenate([params["wconv"], params["bconv"]], axis=0)     # (Cin+1, C)

    # attention projection: wva.T @ (wconv.T v + bconv) + bva, biases folded as last column
    wva_conv = jnp.concatenate([
        _hdot(params["wva"].T, params["wconv"].T),
        _hdot(params["wva"].T, params["bconv"].T) + params["bva"].T], axis=1)   # (A, Cin+1)

    w_rhs, r_off = _pack_weight_slab([
        ("wr_ap", wr_ap),
        ("wc_ap", wc_ap),
        ("emb_wqc", emb_wqc),
        ("wqa_qn", wqa_qn),
        ("wconv_res", wconv_res),
        ("wconv_aug", wconv_aug),
        ("wvn", params["wvn"]),
        ("wc1", params["wc1"]),
        ("wc2", params["wc2"]),
    ])
    w_lhs, l_off = _pack_weight_slab([
        ("wva_conv", wva_conv),
        ("wattT", params["watt"].T),
    ])
    b_row, b_off = _pack_bias_row([
        ("bc_ap", bc_ap),
        ("bqc", params["bqc"]),
        ("bqa_qn", bqa_qn),
        ("bvn", params["bvn"]),
        ("bc1", params["bc1"]),
        ("bc2", params["bc2"]),
        ("batt", params["batt"]),
    ])

    if batch_block is None:
        batch_block = B                 # single grid step: best at small B on all generations
    assert B % batch_block == 0
    grid = (B // batch_block,)

    kernel = functools.partial(
        top_down_verb_kernel,
        sizes={"HID": HID, "NL": NL, "A": A, "Cin1": Cin + 1},
        r_off=r_off, l_off=l_off, b_off=b_off,
    )

    # Attention branch dominates the (tiny) flop count; the hint mostly tells XLA this call
    # is a few microseconds so it can be overlapped instead of serialized around.
    flops = 2 * B * HW * (A * (Cin + 1) + A + (Cin + 1)) + 4 * B * HID * (2 * HID + C)
    bytes_accessed = 4 * (int(v_aug.size) + int(w_rhs.size) + int(w_lhs.size)
                          + int(b_row.size) + B * NV)

    return pl.pallas_call(
        kernel,
        out_shape=jax.ShapeDtypeStruct((B, NV), jnp.float32),
        grid_spec=pltpu.PrefetchScalarGridSpec(
            num_scalar_prefetch=0,
            grid=grid,
            in_specs=[
                pl.BlockSpec((batch_block, Cin + 1, HW), lambda i: (i, 0, 0)),
                pl.BlockSpec(w_rhs.shape, lambda i: (0, 0)),
                pl.BlockSpec(w_lhs.shape, lambda i: (0, 0)),
                pl.BlockSpec(b_row.shape, lambda i: (0, 0)),
            ],
            out_specs=pl.BlockSpec((batch_block, NV), lambda i: (i, 0)),
        ),
        compiler_params=pltpu.CompilerParams(dimension_semantics=("parallel",)),
        cost_estimate=pl.CostEstimate(flops=flops, transcendentals=B * HW,
                                      bytes_accessed=bytes_accessed),
    )(v_aug, w_rhs, w_lhs, b_row)


# -------------------- synthetic module parameters --------------------

def init_params(key, Cin=3, C=32, HID=32, NL=10, E=16, Q=32, A=32, CH=32, NV=12):
    keys = iter(jax.random.split(key, 40))

    def w(shape, scale=0.1):
        return (scale * jax.random.normal(next(keys), shape)).astype(jnp.float32)

    return {
        "wr_a": w((Cin, HID)), "br_a": w((1, HID)),
        "wr_p": w((Cin, HID)), "br_p": w((1, HID)),
        "wc_a": w((HID, NL)), "bc_a": w((1, NL)),
        "wc_p": w((HID, NL)), "bc_p": w((1, NL)),
        "emb": w((NL, E)),
        "wqc": w((2 * E, Q)), "bqc": w((1, Q)),
        "wconv": w((Cin, C)), "bconv": w((1, C)),
        "wres": w((C, HID)), "bres": w((1, HID)),
        "wva": w((C, A)), "bva": w((1, A)),
        "wqa": w((Q, A)), "bqa": w((1, A)),
        "watt": w((A, 1)), "batt": w((1, 1)),
        "wvn": w((C, HID)), "bvn": w((1, HID)),
        "wqn": w((Q, HID)), "bqn": w((1, HID)),
        "wc1": w((HID, CH)), "bc1": w((1, CH)),
        "wc2": w((CH, NV)), "bc2": w((1, NV)),
    }


def reference_forward(x_nchw, p):
    """Pure-JAX reference mirroring the PyTorch forward (eval mode)."""
    hp = jax.lax.Precision.HIGHEST
    B, Cin, H, W = x_nchw.shape
    HW = H * W
    v_flat = jnp.transpose(x_nchw.reshape(B, Cin, HW), (0, 2, 1))

    def lin(x, w, b, relu=False):
        y = jnp.dot(x, w, precision=hp) + b
        return jnp.maximum(y, 0.0) if relu else y

    pooled = v_flat.mean(axis=1)                                  # (B, Cin)
    rep_a = lin(pooled, p["wr_a"], p["br_a"], True)
    rep_p = lin(pooled, p["wr_p"], p["br_p"], True)
    pred_a = lin(rep_a, p["wc_a"], p["bc_a"])
    pred_p = lin(rep_p, p["wc_p"], p["bc_p"])
    role_rep_combo = rep_a + rep_p

    agent_embd = p["emb"][jnp.argmax(pred_a, axis=-1)]
    place_embd = p["emb"][jnp.argmax(pred_p, axis=-1)]
    concat = jnp.concatenate([agent_embd, place_embd], axis=-1)
    q_emb = lin(concat, p["wqc"], p["bqc"])                       # Dropout_C = identity (eval)

    feat = jnp.einsum("bpc,cd->bpd", v_flat, p["wconv"], precision=hp) + p["bconv"]
    img_flat = lin(feat.mean(axis=1), p["wres"], p["bres"])
    ext_ctx = img_flat * role_rep_combo

    v_proj = jnp.maximum(jnp.einsum("bpc,ca->bpa", feat, p["wva"], precision=hp) + p["bva"], 0.0)
    q_proj = lin(q_emb, p["wqa"], p["bqa"], True)
    joint = v_proj * q_proj[:, None, :]
    att_logits = jnp.einsum("bpa,ao->bpo", joint, p["watt"], precision=hp) + p["batt"]
    att = jax.nn.softmax(att_logits, axis=1)
    v_emb = (att * feat).sum(axis=1)

    v_repr = lin(v_emb, p["wvn"], p["bvn"], True)
    q_repr = lin(q_emb, p["wqn"], p["bqn"], True)
    out = q_repr * v_repr + ext_ctx
    h = lin(out, p["wc1"], p["bc1"], True)
    return lin(h, p["wc2"], p["bc2"])


if __name__ == "__main__":
    key = jax.random.PRNGKey(0)
    kx, kp = jax.random.split(key)
    B, Cin, H, W = 2, 3, 16, 16
    x = jax.random.normal(kx, (B, Cin, H, W), dtype=jnp.float32)
    params = init_params(kp)

    logits = top_down_verb_forward(x, params)
    logits = jax.block_until_ready(logits)

    ref = reference_forward(x, params)
    np.testing.assert_allclose(np.asarray(logits), np.asarray(ref), rtol=2e-3, atol=2e-3)
    print("KERNEL_OK")
</pallas_src>

<mosaic_0001>
module attributes {stable_mosaic.version = 11 : i64} {
  func.func @top_down_verb_kernel(%arg0: i32, %arg1: memref<2x4x256xf32, #tpu.memory_space<vmem>>, %arg2: memref<64x1152xf32, #tpu.memory_space<vmem>>, %arg3: memref<32x256xf32, #tpu.memory_space<vmem>>, %arg4: memref<1x896xf32, #tpu.memory_space<vmem>>, %arg5: memref<2x12xf32, #tpu.memory_space<vmem>>) attributes {dimension_semantics = [#tpu.dimension_semantics<parallel>], iteration_bounds = array<i64: 1>, scalar_prefetch = 0 : i64, scratch_operands = 0 : i64, tpu.core_type = #tpu.core_type<tc>, window_params = [{transform_indices = @transform_0, window_bounds = array<i64: 2, 4, 256>}, {pipeline_mode = #tpu.pipeline_mode<synchronous>, transform_indices = @transform_1, window_bounds = array<i64: 64, 1152>}, {pipeline_mode = #tpu.pipeline_mode<synchronous>, transform_indices = @transform_2, window_bounds = array<i64: 32, 256>}, {pipeline_mode = #tpu.pipeline_mode<synchronous>, transform_indices = @transform_3, window_bounds = array<i64: 1, 896>}, {transform_indices = @transform_4, window_bounds = array<i64: 2, 12>}]} {
    %c0 = arith.constant 0 : index
    %c0_0 = arith.constant 0 : index
    %c0_1 = arith.constant 0 : index
    %0 = vector.load %arg1[%c0, %c0_0, %c0_1] : memref<2x4x256xf32, #tpu.memory_space<vmem>>, vector<2x4x256xf32>
    %cst = arith.constant dense<0.000000e+00> : vector<2x4xf32>
    %1 = vector.multi_reduction <add>, %0, %cst [2] : vector<2x4x256xf32> to vector<2x4xf32>
    %cst_2 = arith.constant 2.560000e+02 : f32
    %2 = vector.broadcast %cst_2 : f32 to vector<2x4xf32>
    %3 = arith.divf %1, %2 : vector<2x4xf32>
    %c0_3 = arith.constant 0 : index
    %c0_4 = arith.constant 0 : index
    %4 = vector.load %arg2[%c0_3, %c0_4] : memref<64x1152xf32, #tpu.memory_space<vmem>>, vector<4x64xf32>
    %cst_5 = arith.constant dense<0.000000e+00> : vector<2x64xf32>
    %5 = tpu.matmul %3, %4, %cst_5 {dimension_numbers = #tpu.dot_dimension_numbers<[1], [0], [0], [1], [0, 0, 1, 1], [], []>} : vector<2x4xf32>, vector<4x64xf32>, vector<2x64xf32> -> vector<2x64xf32>
    %cst_6 = arith.constant 0.000000e+00 : f32
    %6 = vector.broadcast %cst_6 : f32 to vector<2x64xf32>
    %7 = arith.maximumf %5, %6 : vector<2x64xf32>
    %8 = vector.extract_strided_slice %7 {offsets = [0, 0], sizes = [2, 32], strides = [1, 1]} : vector<2x64xf32> to vector<2x32xf32>
    %9 = vector.extract_strided_slice %7 {offsets = [0, 32], sizes = [2, 32], strides = [1, 1]} : vector<2x64xf32> to vector<2x32xf32>
    %10 = arith.addf %8, %9 : vector<2x32xf32>
    %c0_7 = arith.constant 0 : index
    %c128 = arith.constant 128 : index
    %11 = vector.load %arg2[%c0_7, %c128] : memref<64x1152xf32, #tpu.memory_space<vmem>>, vector<64x20xf32>
    %cst_8 = arith.constant dense<0.000000e+00> : vector<2x20xf32>
    %12 = tpu.matmul %7, %11, %cst_8 {dimension_numbers = #tpu.dot_dimension_numbers<[1], [0], [0], [1], [0, 0, 1, 1], [], []>} : vector<2x64xf32>, vector<64x20xf32>, vector<2x20xf32> -> vector<2x20xf32>
    %c0_9 = arith.constant 0 : index
    %c0_10 = arith.constant 0 : index
    %13 = vector.load %arg4[%c0_9, %c0_10] : memref<1x896xf32, #tpu.memory_space<vmem>>, vector<1x20xf32>
    %14 = vector.broadcast %13 : vector<1x20xf32> to vector<2x20xf32>
    %15 = arith.addf %12, %14 : vector<2x20xf32>
    %16 = tpu.iota {dimensions = array<i32: 1>} : vector<2x20xi32>
    %c10_i32 = arith.constant 10 : i32
    %17 = vector.broadcast %c10_i32 : i32 to vector<2x20xi32>
    %18 = arith.cmpi slt, %16, %17 : vector<2x20xi32>
    %cst_11 = arith.constant -3.40282347E+38 : f32
    %19 = vector.broadcast %cst_11 : f32 to vector<2x20xf32>
    %20 = arith.select %18, %15, %19 : vector<2x20xi1>, vector<2x20xf32>
    %cst_12 = arith.constant dense<0xFF800000> : vector<2xf32>
    %21 = vector.multi_reduction <maximumf>, %20, %cst_12 [1] : vector<2x20xf32> to vector<2xf32>
    %22 = vector.shape_cast %21 : vector<2xf32> to vector<2x1xf32>
    %23 = arith.select %18, %19, %15 : vector<2x20xi1>, vector<2x20xf32>
    %cst_13 = arith.constant dense<0xFF800000> : vector<2xf32>
    %24 = vector.multi_reduction <maximumf>, %23, %cst_13 [1] : vector<2x20xf32> to vector<2xf32>
    %25 = vector.shape_cast %24 : vector<2xf32> to vector<2x1xf32>
    %26 = vector.broadcast %22 : vector<2x1xf32> to vector<2x20xf32>
    %27 = arith.cmpf oeq, %15, %26 : vector<2x20xf32>
    %28 = arith.andi %18, %27 : vector<2x20xi1>
    %c20_i32 = arith.constant 20 : i32
    %29 = vector.broadcast %c20_i32 : i32 to vector<2x20xi32>
    %30 = arith.select %28, %16, %29 : vector<2x20xi1>, vector<2x20xi32>
    %cst_14 = arith.constant dense<2147483647> : vector<2xi32>
    %31 = vector.multi_reduction <minsi>, %30, %cst_14 [1] : vector<2x20xi32> to vector<2xi32>
    %32 = vector.shape_cast %31 : vector<2xi32> to vector<2x1xi32>
    %cst_15 = arith.constant dense<true> : vector<2x20xi1>
    %33 = arith.xori %18, %cst_15 : vector<2x20xi1>
    %34 = vector.broadcast %25 : vector<2x1xf32> to vector<2x20xf32>
    %35 = arith.cmpf oeq, %15, %34 : vector<2x20xf32>
    %36 = arith.andi %33, %35 : vector<2x20xi1>
    %c20_i32_16 = arith.constant 20 : i32
    %37 = vector.broadcast %c20_i32_16 : i32 to vector<2x20xi32>
    %38 = arith.select %36, %16, %37 : vector<2x20xi1>, vector<2x20xi32>
    %cst_17 = arith.constant dense<2147483647> : vector<2xi32>
    %39 = vector.multi_reduction <minsi>, %38, %cst_17 [1] : vector<2x20xi32> to vector<2xi32>
    %40 = vector.shape_cast %39 : vector<2xi32> to vector<2x1xi32>
    %41 = vector.broadcast %32 : vector<2x1xi32> to vector<2x20xi32>
    %42 = arith.cmpi eq, %16, %41 : vector<2x20xi32>
    %43 = vector.broadcast %40 : vector<2x1xi32> to vector<2x20xi32>
    %44 = arith.cmpi eq, %16, %43 : vector<2x20xi32>
    %45 = arith.ori %42, %44 : vector<2x20xi1>
    %46 = arith.extui %45 : vector<2x20xi1> to vector<2x20xi32>
    %47 = arith.sitofp %46 : vector<2x20xi32> to vector<2x20xf32>
    %c0_18 = arith.constant 0 : index
    %c256 = arith.constant 256 : index
    %48 = vector.load %arg2[%c0_18, %c256] : memref<64x1152xf32, #tpu.memory_space<vmem>>, vector<20x32xf32>
    %cst_19 = arith.constant dense<0.000000e+00> : vector<2x32xf32>
    %49 = tpu.matmul %47, %48, %cst_19 {dimension_numbers = #tpu.dot_dimension_numbers<[1], [0], [0], [1], [0, 0, 1, 1], [], []>} : vector<2x20xf32>, vector<20x32xf32>, vector<2x32xf32> -> vector<2x32xf32>
    %c0_20 = arith.constant 0 : index
    %c128_21 = arith.constant 128 : index
    %50 = vector.load %arg4[%c0_20, %c128_21] : memref<1x896xf32, #tpu.memory_space<vmem>>, vector<1x32xf32>
    %51 = vector.broadcast %50 : vector<1x32xf32> to vector<2x32xf32>
    %52 = arith.addf %49, %51 : vector<2x32xf32>
    %c0_22 = arith.constant 0 : index
    %c384 = arith.constant 384 : index
    %53 = vector.load %arg2[%c0_22, %c384] : memref<64x1152xf32, #tpu.memory_space<vmem>>, vector<32x64xf32>
    %cst_23 = arith.constant dense<0.000000e+00> : vector<2x64xf32>
    %54 = tpu.matmul %52, %53, %cst_23 {dimension_numbers = #tpu.dot_dimension_numbers<[1], [0], [0], [1], [0, 0, 1, 1], [], []>} : vector<2x32xf32>, vector<32x64xf32>, vector<2x64xf32> -> vector<2x64xf32>
    %c0_24 = arith.constant 0 : index
    %c256_25 = arith.constant 256 : index
    %55 = vector.load %arg4[%c0_24, %c256_25] : memref<1x896xf32, #tpu.memory_space<vmem>>, vector<1x64xf32>
    %56 = vector.broadcast %55 : vector<1x64xf32> to vector<2x64xf32>
    %57 = arith.addf %54, %56 : vector<2x64xf32>
    %cst_26 = arith.constant 0.000000e+00 : f32
    %58 = vector.broadcast %cst_26 : f32 to vector<2x64xf32>
    %59 = arith.maximumf %57, %58 : vector<2x64xf32>
    %60 = vector.extract_strided_slice %59 {offsets = [0, 0], sizes = [2, 32], strides = [1, 1]} : vector<2x64xf32> to vector<2x32xf32>
    %61 = vector.extract_strided_slice %59 {offsets = [0, 32], sizes = [2, 32], strides = [1, 1]} : vector<2x64xf32> to vector<2x32xf32>
    %c0_27 = arith.constant 0 : index
    %c512 = arith.constant 512 : index
    %62 = vector.load %arg2[%c0_27, %c512] : memref<64x1152xf32, #tpu.memory_space<vmem>>, vector<4x32xf32>
    %cst_28 = arith.constant dense<0.000000e+00> : vector<2x32xf32>
    %63 = tpu.matmul %3, %62, %cst_28 {dimension_numbers = #tpu.dot_dimension_numbers<[1], [0], [0], [1], [0, 0, 1, 1], [], []>} : vector<2x4xf32>, vector<4x32xf32>, vector<2x32xf32> -> vector<2x32xf32>
    %64 = arith.mulf %63, %10 : vector<2x32xf32>
    %c0_29 = arith.constant 0 : index
    %c0_30 = arith.constant 0 : index
    %65 = vector.load %arg3[%c0_29, %c0_30] : memref<32x256xf32, #tpu.memory_space<vmem>>, vector<32x4xf32>
    %c0_31 = arith.constant 0 : index
    %c128_32 = arith.constant 128 : index
    %66 = vector.load %arg3[%c0_31, %c128_32] : memref<32x256xf32, #tpu.memory_space<vmem>>, vector<1x32xf32>
    %c0_33 = arith.constant 0 : index
    %c768 = arith.constant 768 : index
    %67 = vector.load %arg4[%c0_33, %c768] : memref<1x896xf32, #tpu.memory_space<vmem>>, vector<1x1xf32>
    %68 = vector.shape_cast %67 : vector<1x1xf32> to vector<1x1xf32>
    %69 = vector.broadcast %68 : vector<1x1xf32> to vector<1x256xf32>
    %70 = vector.extract_strided_slice %0 {offsets = [0, 0, 0], sizes = [1, 4, 256], strides = [1, 1, 1]} : vector<2x4x256xf32> to vector<1x4x256xf32>
    %71 = vector.shape_cast %70 : vector<1x4x256xf32> to vector<4x256xf32>
    %cst_34 = arith.constant dense<0.000000e+00> : vector<32x256xf32>
    %72 = tpu.matmul %65, %71, %cst_34 {dimension_numbers = #tpu.dot_dimension_numbers<[1], [0], [0], [1], [0, 0, 1, 1], [], []>} : vector<32x4xf32>, vector<4x256xf32>, vector<32x256xf32> -> vector<32x256xf32>
    %cst_35 = arith.constant 0.000000e+00 : f32
    %73 = vector.broadcast %cst_35 : f32 to vector<32x256xf32>
    %74 = arith.maximumf %72, %73 : vector<32x256xf32>
    %75 = vector.extract_strided_slice %60 {offsets = [0, 0], sizes = [1, 32], strides = [1, 1]} : vector<2x32xf32> to vector<1x32xf32>
    %76 = arith.mulf %66, %75 : vector<1x32xf32>
    %cst_36 = arith.constant dense<0.000000e+00> : vector<1x256xf32>
    %77 = tpu.matmul %76, %74, %cst_36 {dimension_numbers = #tpu.dot_dimension_numbers<[1], [0], [0], [1], [0, 0, 1, 1], [], []>} : vector<1x32xf32>, vector<32x256xf32>, vector<1x256xf32> -> vector<1x256xf32>
    %78 = arith.addf %77, %69 : vector<1x256xf32>
    %cst_37 = arith.constant dense<0xFF800000> : vector<1xf32>
    %79 = vector.multi_reduction <maximumf>, %78, %cst_37 [1] : vector<1x256xf32> to vector<1xf32>
    %80 = vector.shape_cast %79 : vector<1xf32> to vector<1x1xf32>
    %81 = vector.broadcast %80 : vector<1x1xf32> to vector<1x256xf32>
    %82 = arith.subf %78, %81 : vector<1x256xf32>
    %83 = math.exp %82 : vector<1x256xf32>
    %cst_38 = arith.constant dense<0.000000e+00> : vector<1x4xf32>
    %84 = tpu.matmul %83, %71, %cst_38 {dimension_numbers = #tpu.dot_dimension_numbers<[1], [1], [0], [0], [0, 0, 1, 0], [], []>} : vector<1x256xf32>, vector<4x256xf32>, vector<1x4xf32> -> vector<1x4xf32>
    %85 = vector.extract_strided_slice %0 {offsets = [1, 0, 0], sizes = [1, 4, 256], strides = [1, 1, 1]} : vector<2x4x256xf32> to vector<1x4x256xf32>
    %86 = vector.shape_cast %85 : vector<1x4x256xf32> to vector<4x256xf32>
    %cst_39 = arith.constant dense<0.000000e+00> : vector<32x256xf32>
    %87 = tpu.matmul %65, %86, %cst_39 {dimension_numbers = #tpu.dot_dimension_numbers<[1], [0], [0], [1], [0, 0, 1, 1], [], []>} : vector<32x4xf32>, vector<4x256xf32>, vector<32x256xf32> -> vector<32x256xf32>
    %cst_40 = arith.constant 0.000000e+00 : f32
    %88 = vector.broadcast %cst_40 : f32 to vector<32x256xf32>
    %89 = arith.maximumf %87, %88 : vector<32x256xf32>
    %90 = vector.extract_strided_slice %60 {offsets = [1, 0], sizes = [1, 32], strides = [1, 1]} : vector<2x32xf32> to vector<1x32xf32>
    %91 = arith.mulf %66, %90 : vector<1x32xf32>
    %cst_41 = arith.constant dense<0.000000e+00> : vector<1x256xf32>
    %92 = tpu.matmul %91, %89, %cst_41 {dimension_numbers = #tpu.dot_dimension_numbers<[1], [0], [0], [1], [0, 0, 1, 1], [], []>} : vector<1x32xf32>, vector<32x256xf32>, vector<1x256xf32> -> vector<1x256xf32>
    %93 = arith.addf %92, %69 : vector<1x256xf32>
    %cst_42 = arith.constant dense<0xFF800000> : vector<1xf32>
    %94 = vector.multi_reduction <maximumf>, %93, %cst_42 [1] : vector<1x256xf32> to vector<1xf32>
    %95 = vector.shape_cast %94 : vector<1xf32> to vector<1x1xf32>
    %96 = vector.broadcast %95 : vector<1x1xf32> to vector<1x256xf32>
    %97 = arith.subf %93, %96 : vector<1x256xf32>
    %98 = math.exp %97 : vector<1x256xf32>
    %cst_43 = arith.constant dense<0.000000e+00> : vector<1x4xf32>
    %99 = tpu.matmul %98, %86, %cst_43 {dimension_numbers = #tpu.dot_dimension_numbers<[1], [1], [0], [0], [0, 0, 1, 0], [], []>} : vector<1x256xf32>, vector<4x256xf32>, vector<1x4xf32> -> vector<1x4xf32>
    %100 = tpu.concatenate %84, %99 in 0 : vector<1x4xf32>, vector<1x4xf32> -> vector<2x4xf32>
    %101 = vector.extract_strided_slice %100 {offsets = [0, 3], sizes = [2, 1], strides = [1, 1]} : vector<2x4xf32> to vector<2x1xf32>
    %102 = vector.broadcast %101 : vector<2x1xf32> to vector<2x4xf32>
    %103 = arith.divf %100, %102 : vector<2x4xf32>
    %c0_44 = arith.constant 0 : index
    %c640 = arith.constant 640 : index
    %104 = vector.load %arg2[%c0_44, %c640] : memref<64x1152xf32, #tpu.memory_space<vmem>>, vector<4x32xf32>
    %cst_45 = arith.constant dense<0.000000e+00> : vector<2x32xf32>
    %105 = tpu.matmul %103, %104, %cst_45 {dimension_numbers = #tpu.dot_dimension_numbers<[1], [0], [0], [1], [0, 0, 1, 1], [], []>} : vector<2x4xf32>, vector<4x32xf32>, vector<2x32xf32> -> vector<2x32xf32>
    %c0_46 = arith.constant 0 : index
    %c768_47 = arith.constant 768 : index
    %106 = vector.load %arg2[%c0_46, %c768_47] : memref<64x1152xf32, #tpu.memory_space<vmem>>, vector<32x32xf32>
    %cst_48 = arith.constant dense<0.000000e+00> : vector<2x32xf32>
    %107 = tpu.matmul %105, %106, %cst_48 {dimension_numbers = #tpu.dot_dimension_numbers<[1], [0], [0], [1], [0, 0, 1, 1], [], []>} : vector<2x32xf32>, vector<32x32xf32>, vector<2x32xf32> -> vector<2x32xf32>
    %c0_49 = arith.constant 0 : index
    %c384_50 = arith.constant 384 : index
    %108 = vector.load %arg4[%c0_49, %c384_50] : memref<1x896xf32, #tpu.memory_space<vmem>>, vector<1x32xf32>
    %109 = vector.broadcast %108 : vector<1x32xf32> to vector<2x32xf32>
    %110 = arith.addf %107, %109 : vector<2x32xf32>
    %cst_51 = arith.constant 0.000000e+00 : f32
    %111 = vector.broadcast %cst_51 : f32 to vector<2x32xf32>
    %112 = arith.maximumf %110, %111 : vector<2x32xf32>
    %113 = arith.mulf %61, %112 : vector<2x32xf32>
    %114 = arith.addf %113, %64 : vector<2x32xf32>
    %c0_52 = arith.constant 0 : index
    %c896 = arith.constant 896 : index
    %115 = vector.load %arg2[%c0_52, %c896] : memref<64x1152xf32, #tpu.memory_space<vmem>>, vector<32x32xf32>
    %cst_53 = arith.constant dense<0.000000e+00> : vector<2x32xf32>
    %116 = tpu.matmul %114, %115, %cst_53 {dimension_numbers = #tpu.dot_dimension_numbers<[1], [0], [0], [1], [0, 0, 1, 1], [], []>} : vector<2x32xf32>, vector<32x32xf32>, vector<2x32xf32> -> vector<2x32xf32>
    %c0_54 = arith.constant 0 : index
    %c512_55 = arith.constant 512 : index
    %117 = vector.load %arg4[%c0_54, %c512_55] : memref<1x896xf32, #tpu.memory_space<vmem>>, vector<1x32xf32>
    %118 = vector.broadcast %117 : vector<1x32xf32> to vector<2x32xf32>
    %119 = arith.addf %116, %118 : vector<2x32xf32>
    %cst_56 = arith.constant 0.000000e+00 : f32
    %120 = vector.broadcast %cst_56 : f32 to vector<2x32xf32>
    %121 = arith.maximumf %119, %120 : vector<2x32xf32>
    %c0_57 = arith.constant 0 : index
    %c1024 = arith.constant 1024 : index
    %122 = vector.load %arg2[%c0_57, %c1024] : memref<64x1152xf32, #tpu.memory_space<vmem>>, vector<32x12xf32>
    %cst_58 = arith.constant dense<0.000000e+00> : vector<2x12xf32>
    %123 = tpu.matmul %121, %122, %cst_58 {dimension_numbers = #tpu.dot_dimension_numbers<[1], [0], [0], [1], [0, 0, 1, 1], [], []>} : vector<2x32xf32>, vector<32x12xf32>, vector<2x12xf32> -> vector<2x12xf32>
    %c0_59 = arith.constant 0 : index
    %c640_60 = arith.constant 640 : index
    %124 = vector.load %arg4[%c0_59, %c640_60] : memref<1x896xf32, #tpu.memory_space<vmem>>, vector<1x12xf32>
    %125 = vector.broadcast %124 : vector<1x12xf32> to vector<2x12xf32>
    %126 = arith.addf %123, %125 : vector<2x12xf32>
    %c0_61 = arith.constant 0 : index
    %c0_62 = arith.constant 0 : index
    %127 = vector.load %arg5[%c0_61, %c0_62] : memref<2x12xf32, #tpu.memory_space<vmem>>, vector<2x12xf32>
    tpu.vector_store %arg5[%c0_61, %c0_62], %126 {strides = array<i32>} : memref<2x12xf32, #tpu.memory_space<vmem>>, vector<2x12xf32>,
    return
  }
  func.func @transform_0(%arg0: i32) -> (i32, i32, i32) {
    %c0_i32 = arith.constant 0 : i32
    %c0_i32_0 = arith.constant 0 : i32
    %c0_i32_1 = arith.constant 0 : i32
    return %arg0, %c0_i32, %c0_i32_0 : i32, i32, i32
  }
  func.func @transform_1(%arg0: i32) -> (i32, i32) {
    %c0_i32 = arith.constant 0 : i32
    %c0_i32_0 = arith.constant 0 : i32
    %c0_i32_1 = arith.constant 0 : i32
    return %c0_i32, %c0_i32_0 : i32, i32
  }
  func.func @transform_2(%arg0: i32) -> (i32, i32) {
    %c0_i32 = arith.constant 0 : i32
    %c0_i32_0 = arith.constant 0 : i32
    %c0_i32_1 = arith.constant 0 : i32
    return %c0_i32, %c0_i32_0 : i32, i32
  }
  func.func @transform_3(%arg0: i32) -> (i32, i32) {
    %c0_i32 = arith.constant 0 : i32
    %c0_i32_0 = arith.constant 0 : i32
    %c0_i32_1 = arith.constant 0 : i32
    return %c0_i32, %c0_i32_0 : i32, i32
  }
  func.func @transform_4(%arg0: i32) -> (i32, i32) {
    %c0_i32 = arith.constant 0 : i32
    %c0_i32_0 = arith.constant 0 : i32
    return %arg0, %c0_i32 : i32, i32
  }
}

</mosaic_0001>

<llo_original>
// kernel: tpu_custom_call.1
$region0: #{tpu_custom_call.1}
  #allocation0 [shape = 'u32[]', space=smem, size = 0x4, offset = 0x4, fixed_abs, tag = 'smem constant byte address 0x4 - core index']
  #allocation1 [shape = 'u32[72,128]{1,0:T(1,128)}', space=vmem, size = 0x9000, scoped, tag = 'internal scratch']
  %s0 = inlined_call_operand.hbm [shape: f32[2,4,256], index: 0, kind: input, shape index: {}]
  %s1 = inlined_call_operand.hbm [shape: f32[64,1152], index: 1, kind: input, shape index: {}]
  %s2 = inlined_call_operand.hbm [shape: f32[32,256], index: 2, kind: input, shape index: {}]
  %s3 = inlined_call_operand.hbm [shape: f32[1,896], index: 3, kind: input, shape index: {}]
  %s4 = inlined_call_operand.hbm [shape: f32[2,12], index: 4, kind: output, shape index: {}]
  %s5 = sld [smem:[#allocation0]]
  $region42: #{tpu_custom_call.1} parent=0
    _
  %s7 = ssub.s32 1, %s5
  %s8 = scalar_select 0, %s7, %s5
  $region1: #{tpu_custom_call.1} parent=0
    #allocation2 [shape = 'u8[8192]{0}', space=vmem, size = 0x2000, scoped, tag = 'input window, operand 0, single buffered']
    #allocation3 [shape = 's32[1]{0}', space=sflag, size = 0x4, scoped, tag = 'scoped memory for tpu_custom_call.1']
    #allocation4 [shape = 's32[1]{0}', space=sflag, size = 0x4, scoped, tag = 'scoped memory for tpu_custom_call.1']
    #allocation5 [shape = 'u8[294912]{0}', space=vmem, size = 0x48000, scoped, tag = 'input window, operand 1, single buffered']
    #allocation6 [shape = 's32[1]{0}', space=sflag, size = 0x4, scoped, tag = 'scoped memory for tpu_custom_call.1']
    #allocation7 [shape = 'u8[32768]{0}', space=vmem, size = 0x8000, scoped, tag = 'input window, operand 2, single buffered']
    #allocation8 [shape = 'u8[3584]{0}', space=vmem, size = 0x1000, scoped, tag = 'input window, operand 3, single buffered']
    #allocation9 [shape = 's32[1]{0}', space=sflag, size = 0x4, scoped, tag = 'scoped memory for tpu_custom_call.1']
    #allocation10 [shape = 'u8[1024]{0}', space=vmem, size = 0x400, scoped, tag = 'output window, operand 0, single buffered']
    %9 = vsyncpa [#allocation3], 0
    %10 = vsyncpa [#allocation6], 0
    %11 = vsyncpa [#allocation9], 0
    %12 = vsyncpa [#allocation4], 0
    // Predicated region
    $region2: #{tpu_custom_call.1} parent=1 // pred_check
      _
    $region3: #{tpu_custom_call.1} parent=1 // pred_check_branch
      %14 = sbr.rel (0) target = $region5
    $region4: #{tpu_custom_call.1} parent=1 // pred_region
      %16 = vsyncadd [#allocation3], 0
      %s17 = sshll.u32 %s0, 4
      %s18 = int_to_ptr.hbm [resolvable:$true] %s17
      %s19 = sshll.u32 [#allocation2], 4
      %s20 = int_to_ptr.vmem [resolvable:$true] %s19
      %25 = dma.hbm_to_vmem [thread:$0]  %s18, 256, %s20, [#allocation3], 128, 128, 8
    $region5: #{tpu_custom_call.1} parent=1 // pred_fallthru
      _
    // Predicated region
    $region6: #{tpu_custom_call.1} parent=1 // pred_check
      _
    $region7: #{tpu_custom_call.1} parent=1 // pred_check_branch
      %27 = sbr.rel (0) target = $region9
    $region8: #{tpu_custom_call.1} parent=1 // pred_region
      %29 = vsyncadd [#allocation6], 0
      %s30 = sshll.u32 %s1, 4
      %s31 = int_to_ptr.hbm [resolvable:$true] %s30
      %s32 = sshll.u32 [#allocation5], 4
      %s33 = int_to_ptr.vmem [resolvable:$true] %s32
      %38 = dma.hbm_to_vmem [thread:$0]  %s31, 9216, %s33, [#allocation6], 1152, 1152, 72
    $region9: #{tpu_custom_call.1} parent=1 // pred_fallthru
      _
    // Predicated region
    $region10: #{tpu_custom_call.1} parent=1 // pred_check
      _
    $region11: #{tpu_custom_call.1} parent=1 // pred_check_branch
      %40 = sbr.rel (0) target = $region13
    $region12: #{tpu_custom_call.1} parent=1 // pred_region
      %42 = vsyncadd [#allocation6], 0
      %s43 = sshll.u32 %s2, 4
      %s44 = int_to_ptr.hbm [resolvable:$true] %s43
      %s45 = sshll.u32 [#allocation7], 4
      %s46 = int_to_ptr.vmem [resolvable:$true] %s45
      %51 = dma.hbm_to_vmem [thread:$0]  %s44, 1024, %s46, [#allocation6], 256, 256, 16
    $region13: #{tpu_custom_call.1} parent=1 // pred_fallthru
      _
    // Predicated region
    $region14: #{tpu_custom_call.1} parent=1 // pred_check
      _
    $region15: #{tpu_custom_call.1} parent=1 // pred_check_branch
      %53 = sbr.rel (0) target = $region17
    $region16: #{tpu_custom_call.1} parent=1 // pred_region
      %55 = vsyncadd [#allocation9], 0
      %s57 = sshll.u32 %s3, 4
      %s58 = int_to_ptr.hbm [resolvable:$true] %s57
      %s59 = sshll.u32 [#allocation8], 4
      %s60 = int_to_ptr.vmem [resolvable:$true] %s59
      %62 = dma.hbm_to_vmem [thread:$0]  %s58, 112, %s60, [#allocation9]
    $region17: #{tpu_custom_call.1} parent=1 // pred_fallthru
      _
    // Predicated region
    $region18: #{tpu_custom_call.1} parent=1 // pred_check
      _
    $region19: #{tpu_custom_call.1} parent=1 // pred_check_branch
      %64 = sbr.rel (0) target = $region21
    $region20: #{tpu_custom_call.1} parent=1 // pred_region
      %66 = dma.done [#allocation3], 256
    $region21: #{tpu_custom_call.1} parent=1 // pred_fallthru
      _
    // Predicated region
    $region22: #{tpu_custom_call.1} parent=1 // pred_check
      _
    $region23: #{tpu_custom_call.1} parent=1 // pred_check_branch
      %68 = sbr.rel (0) target = $region25
    $region24: #{tpu_custom_call.1} parent=1 // pred_region
      %70 = dma.done [#allocation6], 9216
    $region25: #{tpu_custom_call.1} parent=1 // pred_fallthru
      _
    // Predicated region
    $region26: #{tpu_custom_call.1} parent=1 // pred_check
      _
    $region27: #{tpu_custom_call.1} parent=1 // pred_check_branch
      %72 = sbr.rel (0) target = $region29
    $region28: #{tpu_custom_call.1} parent=1 // pred_region
      %74 = dma.done [#allocation6], 1024
    $region29: #{tpu_custom_call.1} parent=1 // pred_fallthru
      _
    // Predicated region
    $region30: #{tpu_custom_call.1} parent=1 // pred_check
      _
    $region31: #{tpu_custom_call.1} parent=1 // pred_check_branch
      %76 = sbr.rel (0) target = $region33
    $region32: #{tpu_custom_call.1} parent=1 // pred_region
      %78 = dma.done [#allocation9], 112
    $region33: #{tpu_custom_call.1} parent=1 // pred_fallthru
      _
    %v79 = vld [vmem:[#allocation2] sm:$0xff]
    %v80 = vld [vmem:[#allocation2 + $0x8] sm:$0xff]
    %83 = vst [vmem:[#allocation1] ss:$2 sm:$0xff] %v79
    %v84 = vld.sshfl [vmem:[#allocation1] sm:$0xff pattern:$0x75316420]
    %v85 = vld.sshfl [vmem:[#allocation1 + $0x8] sm:$0xff pattern:$0x75316420]
    %s86 = scalar_lea.vmem [#allocation1], 16
    %87 = vst [vmem:[%s86] ss:$2 sm:$0xff] %v80
    %v88 = vld.sshfl [vmem:[#allocation1 + $0x10] sm:$0xff pattern:$0x75316420]
    %v89 = vld.sshfl [vmem:[#allocation1 + $0x18] sm:$0xff pattern:$0x75316420]
    %vm94 = vcmask 1043456
    %v95 = vsel %vm94, %v84, 0.0
    %v96 = vsel %vm94, %v85, 0.0
    %v97 = vadd.f32 %v95, %v96
    %98 = vadd.xlane.f32.xlu0 %v97
    %v99 = vpop.xlane.xlu0 %98
    %v100 = vsel %vm94, %v88, 0.0
    %v101 = vsel %vm94, %v89, 0.0
    %v102 = vadd.f32 %v100, %v101
    %103 = vadd.xlane.f32.xlu0 %v102
    %v104 = vpop.xlane.xlu0 %103
    %v105 = vrcp.pop 256.0
    %v106 = vmul.f32 256.0, %v105
    %v107 = vsub.f32 1.0, %v106
    %v108 = vmul.f32 %v105, %v107
    %v109 = vadd.f32 %v105, %v108
    %vm110 = vweird.f32 %v105
    %v111 = vsel %vm110, %v105, %v109
    %v112 = vmul.f32 %v99, %v111
    %v113 = vmul.f32 %v104, %v111
    %v114 = vld [vmem:[#allocation5] sm:$0xf]
    %v117 = vlaneseq
    %v118 = vand.u32 %v117, 127
    %v119 = vperm.slane %v112, %v118
    %v120 = vperm.slane %v113, %v118
    %vm121 = vcmask 1041409
    %v122 = vsel %vm121, %v120, %v119
    %vm123 = vcmask 31744
    %v124 = vsel %vm123, %v122, 0
    %v127 = vsel %vm94, %v114, 0
    %129 = vmatpush.msra.mxu0 0.0
    %130 = vmatpush.msra.mxu0 0.0
    %131 = vmatpush.msra.mxu0 0.0
    %132 = vmatpush.msra.mxu0 0.0
    %133 = vmatpush.msra.mxu0 0.0
    %134 = vmatpush.msra.mxu0 0.0
    %135 = vmatpush.msra.mxu0 0.0
    %136 = vmatpush.msra.mxu0 0.0
    %137 = vmatpush.msra.mxu0 0.0
    %138 = vmatpush.msra.mxu0 0.0
    %139 = vmatpush.msra.mxu0 0.0
    %140 = vmatpush.msra.mxu0 0.0
    %141 = vmatpush.msra.mxu0 0.0
    %142 = vmatpush.msra.mxu0 0.0
    %143 = vmatpush.msra.mxu0 0.0
    %144 = vmatpush.msra.mxu0 %v127
    %145 = vmatmul.f32.gmra.mxu0 %v124
    %v146 = vpop.f32.mrf.mxu0
    %v147 = vadd.f32 0.0, %v146
    %148 = vdwg.mxu0
    %v149 = vmax.f32 %v147, 0.0
    %151 = vrot.lane.b32.xlu0 %v149, 96
    %v152 = vpop.permute.xlu0 %151
    %v154 = vadd.f32 %v149, %v152
    %v155 = vld [vmem:[#allocation5 + $0x8] sm:$0xff]
    %v156 = vld [vmem:[#allocation5 + $0x50] sm:$0xff]
    %v157 = vld [vmem:[#allocation5 + $0x98] sm:$0xff]
    %v158 = vld [vmem:[#allocation5 + $0xe0] sm:$0xff]
    %v159 = vld [vmem:[#allocation5 + $0x128] sm:$0xff]
    %v160 = vld [vmem:[#allocation5 + $0x170] sm:$0xff]
    %v161 = vld [vmem:[#allocation5 + $0x1b8] sm:$0xff]
    %v162 = vld [vmem:[#allocation5 + $0x200] sm:$0xff]
    %v163 = vld [vmem:[#allocation8] sm:$0x1]
    %v165 = vperm.slane %v163, 0
    %vm167 = vcmask 523264
    %v168 = vsel %vm167, %v149, 0
    %170 = vmatpush.msra.mxu0 0.0
    %171 = vmatpush.msra.mxu0 0.0
    %172 = vmatpush.msra.mxu0 0.0
    %173 = vmatpush.msra.mxu0 0.0
    %174 = vmatpush.msra.mxu0 0.0
    %175 = vmatpush.msra.mxu0 0.0
    %176 = vmatpush.msra.mxu0 0.0
    %177 = vmatpush.msra.mxu0 0.0
    %178 = vmatpush.msra.mxu0 %v162
    %179 = vmatpush.msra.mxu0 %v161
    %180 = vmatpush.msra.mxu0 %v160
    %181 = vmatpush.msra.mxu0 %v159
    %182 = vmatpush.msra.mxu0 %v158
    %183 = vmatpush.msra.mxu0 %v157
    %184 = vmatpush.msra.mxu0 %v156
    %185 = vmatpush.msra.mxu0 %v155
    %186 = vmatmul.f32.gmra.mxu0 %v168
    %v187 = vpop.f32.mrf.mxu0
    %v188 = vadd.f32 %v165, %v187
    %189 = vdwg.mxu0
    %vm190 = vcmp.lt.s32.totalorder %v118, 10
    %v191 = vsel %vm190, %v188, -3.4028235e+38
    %vm192 = vcmask 156672
    %v193 = vsel %vm192, %v191, -inf
    %194 = vmax.xlane.f32.xlu0 %v193
    %v195 = vpop.xlane.xlu0 %194
    %v196 = vsel %vm190, -3.4028235e+38, %v188
    %v197 = vsel %vm192, %v196, -inf
    %198 = vmax.xlane.f32.xlu0 %v197
    %v199 = vpop.xlane.xlu0 %198
    %vm200 = vcmp.eq.f32.partialorder %v188, %v195
    %vm201 = vmand %vm190, %vm200
    %v202 = vsel %vm201, %v118, 20
    %v203 = vsel %vm192, %v202, 2147483647
    %v204 = vand.u32 %v203, 65535
    %v205 = vshra.s32 %v203, 16
    %v206 = vcvt.s32.f32 %v204
    %v207 = vcvt.s32.f32 %v205
    %208 = vmin.xlane.f32.xlu0 %v207
    %v209 = vpop.xlane.xlu0 %208
    %vm210 = vcmp.eq.f32.partialorder %v207, %v209
    %v211 = vsel %vm210, %v206, inf
    %212 = vmin.xlane.f32.xlu0 %v211
    %v213 = vpop.xlane.xlu0 %212
    %v214 = vcvt.f32.s32 %v213
    %v215 = vcvt.f32.s32 %v209
    %v216 = vshll.u32 %v215, 16
    %v217 = vadd.s32 %v216, %v214
    %vm218 = vmxor %vm190, 1
    %vm219 = vcmp.eq.f32.partialorder %v188, %v199
    %vm220 = vmand %vm218, %vm219
    %v221 = vsel %vm220, %v118, 20
    %v222 = vsel %vm192, %v221, 2147483647
    %v223 = vand.u32 %v222, 65535
    %v224 = vshra.s32 %v222, 16
    %v225 = vcvt.s32.f32 %v223
    %v226 = vcvt.s32.f32 %v224
    %227 = vmin.xlane.f32.xlu0 %v226
    %v228 = vpop.xlane.xlu0 %227
    %vm229 = vcmp.eq.f32.partialorder %v226, %v228
    %v230 = vsel %vm229, %v225, inf
    %231 = vmin.xlane.f32.xlu0 %v230
    %v232 = vpop.xlane.xlu0 %231
    %v233 = vcvt.f32.s32 %v232
    %v234 = vcvt.f32.s32 %v228
    %v235 = vshll.u32 %v234, 16
    %v236 = vadd.s32 %v235, %v233
    %vm237 = vcmp.eq.s32.totalorder %v118, %v217
    %vm238 = vcmp.eq.s32.totalorder %v118, %v236
    %vm239 = vmor %vm237, %vm238
    %v240 = vsel %vm239, 1, 0
    %v241 = vcvt.s32.f32 %v240
    %v242 = vld [vmem:[#allocation5 + $0x10] sm:$0xff]
    %v243 = vld [vmem:[#allocation5 + $0x58] sm:$0xff]
    %v244 = vld [vmem:[#allocation5 + $0xa0] sm:$0xf]
    %v245 = vld [vmem:[#allocation8 + $0x1] sm:$0x1]
    %v247 = vperm.slane %v245, 0
    %vm249 = vcmask 162816
    %v251 = vsel %vm249, %v241, 0
    %v254 = vsel %vm94, %v244, 0
    %256 = vmatpush.msra.mxu0 0.0
    %257 = vmatpush.msra.mxu0 0.0
    %258 = vmatpush.msra.mxu0 0.0
    %259 = vmatpush.msra.mxu0 0.0
    %260 = vmatpush.msra.mxu0 0.0
    %261 = vmatpush.msra.mxu0 0.0
    %262 = vmatpush.msra.mxu0 0.0
    %263 = vmatpush.msra.mxu0 0.0
    %264 = vmatpush.msra.mxu0 0.0
    %265 = vmatpush.msra.mxu0 0.0
    %266 = vmatpush.msra.mxu0 0.0
    %267 = vmatpush.msra.mxu0 0.0
    %268 = vmatpush.msra.mxu0 0.0
    %269 = vmatpush.msra.mxu0 %v254
    %270 = vmatpush.msra.mxu0 %v243
    %271 = vmatpush.msra.mxu0 %v242
    %272 = vmatmul.f32.gmra.mxu0 %v251
    %v273 = vpop.f32.mrf.mxu0
    %v274 = vadd.f32 %v247, %v273
    %275 = vdwg.mxu0
    %v276 = vld [vmem:[#allocation5 + $0x18] sm:$0xff]
    %v277 = vld [vmem:[#allocation5 + $0x60] sm:$0xff]
    %v278 = vld [vmem:[#allocation5 + $0xa8] sm:$0xff]
    %v279 = vld [vmem:[#allocation5 + $0xf0] sm:$0xff]
    %v280 = vld [vmem:[#allocation8 + $0x2] sm:$0x1]
    %v282 = vperm.slane %v280, 0
    %vm284 = vcmask 261120
    %v286 = vsel %vm284, %v274, 0
    %288 = vmatpush.msra.mxu0 0.0
    %289 = vmatpush.msra.mxu0 0.0
    %290 = vmatpush.msra.mxu0 0.0
    %291 = vmatpush.msra.mxu0 0.0
    %292 = vmatpush.msra.mxu0 0.0
    %293 = vmatpush.msra.mxu0 0.0
    %294 = vmatpush.msra.mxu0 0.0
    %295 = vmatpush.msra.mxu0 0.0
    %296 = vmatpush.msra.mxu0 0.0
    %297 = vmatpush.msra.mxu0 0.0
    %298 = vmatpush.msra.mxu0 0.0
    %299 = vmatpush.msra.mxu0 0.0
    %300 = vmatpush.msra.mxu0 %v279
    %301 = vmatpush.msra.mxu0 %v278
    %302 = vmatpush.msra.mxu0 %v277
    %303 = vmatpush.msra.mxu0 %v276
    %304 = vmatmul.f32.gmra.mxu0 %v286
    %v305 = vpop.f32.mrf.mxu0
    %v306 = vadd.f32 %v282, %v305
    %307 = vdwg.mxu0
    %v308 = vmax.f32 %v306, 0.0
    %v309 = vld [vmem:[#allocation5 + $0x20] sm:$0xf]
    %v311 = vsel %vm94, %v309, 0
    %313 = vmatpush.msra.mxu0 0.0
    %314 = vmatpush.msra.mxu0 0.0
    %315 = vmatpush.msra.mxu0 0.0
    %316 = vmatpush.msra.mxu0 0.0
    %317 = vmatpush.msra.mxu0 0.0
    %318 = vmatpush.msra.mxu0 0.0
    %319 = vmatpush.msra.mxu0 0.0
    %320 = vmatpush.msra.mxu0 0.0
    %321 = vmatpush.msra.mxu0 0.0
    %322 = vmatpush.msra.mxu0 0.0
    %323 = vmatpush.msra.mxu0 0.0
    %324 = vmatpush.msra.mxu0 0.0
    %325 = vmatpush.msra.mxu0 0.0
    %326 = vmatpush.msra.mxu0 0.0
    %327 = vmatpush.msra.mxu0 0.0
    %328 = vmatpush.msra.mxu0 %v311
    %329 = vmatmul.f32.gmra.mxu0 %v124
    %v330 = vpop.f32.mrf.mxu0
    %v331 = vadd.f32 0.0, %v330
    %332 = vdwg.mxu0
    %v333 = vmul.f32 %v331, %v154
    %v334 = vld [vmem:[#allocation7] sm:$0xff]
    %v335 = vld [vmem:[#allocation7 + $0x10] sm:$0xff]
    %v336 = vld [vmem:[#allocation7 + $0x20] sm:$0xff]
    %v337 = vld [vmem:[#allocation7 + $0x30] sm:$0xff]
    %v338 = vld [vmem:[#allocation7 + $0x8] ss:$0 sm:$0xff]
    %v339 = vld [vmem:[#allocation8 + $0x6] sm:$0x1]
    %341 = vset.pattern.permute.xlu0 0
    %342 = vperm.xlu0 %341, %v339
    %v343 = vpop.permute.xlu0 %342
    %v345 = vperm.slane %v343, 0
    %346 = vst [vmem:[#allocation1] ss:$2 sm:$0xff] %v79
    %v347 = vld.sshfl [vmem:[#allocation1] sm:$0xff pattern:$0x75316420]
    %v348 = vld.sshfl [vmem:[#allocation1 + $0x8] sm:$0xff pattern:$0x75316420]
    %v350 = vsel %vm123, %v334, 0
    %v353 = vsel %vm123, %v335, 0
    %v356 = vsel %vm123, %v336, 0
    %v359 = vsel %vm123, %v337, 0
    %v361 = vsel %vm94, %v347, 0
    %v363 = vsel %vm94, %v348, 0
    %365 = vmatpush.msra.mxu0 0.0
    %366 = vmatpush.msra.mxu0 0.0
    %367 = vmatpush.msra.mxu0 0.0
    %368 = vmatpush.msra.mxu0 0.0
    %369 = vmatpush.msra.mxu0 0.0
    %370 = vmatpush.msra.mxu0 0.0
    %371 = vmatpush.msra.mxu0 0.0
    %372 = vmatpush.msra.mxu0 0.0
    %373 = vmatpush.msra.mxu0 0.0
    %374 = vmatpush.msra.mxu0 0.0
    %375 = vmatpush.msra.mxu0 0.0
    %376 = vmatpush.msra.mxu0 0.0
    %377 = vmatpush.msra.mxu0 0.0
    %378 = vmatpush.msra.mxu0 0.0
    %379 = vmatpush.msra.mxu0 0.0
    %380 = vmatpush.msra.mxu0 %v361
    %381 = vmatmul.f32.gmra.mxu0 %v350
    %v382 = vpop.f32.mrf.mxu0
    %v383 = vadd.f32 0.0, %v382
    %384 = vmatmul.f32.gmra.mxu0 %v353
    %v385 = vpop.f32.mrf.mxu0
    %v386 = vadd.f32 0.0, %v385
    %387 = vmatmul.f32.gmra.mxu0 %v356
    %v388 = vpop.f32.mrf.mxu0
    %v389 = vadd.f32 0.0, %v388
    %390 = vmatmul.f32.gmra.mxu0 %v359
    %v391 = vpop.f32.mrf.mxu0
    %v392 = vadd.f32 0.0, %v391
    %393 = vdwg.mxu0
    %394 = vmatpush.msra.mxu0 0.0
    %395 = vmatpush.msra.mxu0 0.0
    %396 = vmatpush.msra.mxu0 0.0
    %397 = vmatpush.msra.mxu0 0.0
    %398 = vmatpush.msra.mxu0 0.0
    %399 = vmatpush.msra.mxu0 0.0
    %400 = vmatpush.msra.mxu0 0.0
    %401 = vmatpush.msra.mxu0 0.0
    %402 = vmatpush.msra.mxu0 0.0
    %403 = vmatpush.msra.mxu0 0.0
    %404 = vmatpush.msra.mxu0 0.0
    %405 = vmatpush.msra.mxu0 0.0
    %406 = vmatpush.msra.mxu0 0.0
    %407 = vmatpush.msra.mxu0 0.0
    %408 = vmatpush.msra.mxu0 0.0
    %409 = vmatpush.msra.mxu0 %v363
    %410 = vmatmul.f32.gmra.mxu0 %v350
    %v411 = vpop.f32.mrf.mxu0
    %v412 = vadd.f32 0.0, %v411
    %413 = vmatmul.f32.gmra.mxu0 %v353
    %v414 = vpop.f32.mrf.mxu0
    %v415 = vadd.f32 0.0, %v414
    %416 = vmatmul.f32.gmra.mxu0 %v356
    %v417 = vpop.f32.mrf.mxu0
    %v418 = vadd.f32 0.0, %v417
    %419 = vmatmul.f32.gmra.mxu0 %v359
    %v420 = vpop.f32.mrf.mxu0
    %v421 = vadd.f32 0.0, %v420
    %422 = vdwg.mxu0
    %v423 = vmax.f32 %v383, 0.0
    %v424 = vmax.f32 %v412, 0.0
    %v425 = vmax.f32 %v386, 0.0
    %v426 = vmax.f32 %v415, 0.0
    %v427 = vmax.f32 %v389, 0.0
    %v428 = vmax.f32 %v418, 0.0
    %v429 = vmax.f32 %v392, 0.0
    %v430 = vmax.f32 %v421, 0.0
    %v431 = vmul.f32 %v338, %v308
    %v433 = vsel %vm284, %v431, 0
    %435 = vmatpush.msra.mxu0 0.0
    %436 = vmatpush.msra.mxu0 0.0
    %437 = vmatpush.msra.mxu0 0.0
    %438 = vmatpush.msra.mxu0 0.0
    %439 = vmatpush.msra.mxu0 0.0
    %440 = vmatpush.msra.mxu0 0.0
    %441 = vmatpush.msra.mxu0 0.0
    %442 = vmatpush.msra.mxu0 0.0
    %443 = vmatpush.msra.mxu0 0.0
    %444 = vmatpush.msra.mxu0 0.0
    %445 = vmatpush.msra.mxu0 0.0
    %446 = vmatpush.msra.mxu0 0.0
    %447 = vmatpush.msra.mxu0 %v429
    %448 = vmatpush.msra.mxu0 %v427
    %449 = vmatpush.msra.mxu0 %v425
    %450 = vmatpush.msra.mxu0 %v423
    %451 = vmatmul.f32.gmra.mxu0 %v433
    %v452 = vpop.f32.mrf.mxu0
    %v453 = vadd.f32 %v345, %v452
    %454 = vdwg.mxu0
    %455 = vmatpush.msra.mxu0 0.0
    %456 = vmatpush.msra.mxu0 0.0
    %457 = vmatpush.msra.mxu0 0.0
    %458 = vmatpush.msra.mxu0 0.0
    %459 = vmatpush.msra.mxu0 0.0
    %460 = vmatpush.msra.mxu0 0.0
    %461 = vmatpush.msra.mxu0 0.0
    %462 = vmatpush.msra.mxu0 0.0
    %463 = vmatpush.msra.mxu0 0.0
    %464 = vmatpush.msra.mxu0 0.0
    %465 = vmatpush.msra.mxu0 0.0
    %466 = vmatpush.msra.mxu0 0.0
    %467 = vmatpush.msra.mxu0 %v430
    %468 = vmatpush.msra.mxu0 %v428
    %469 = vmatpush.msra.mxu0 %v426
    %470 = vmatpush.msra.mxu0 %v424
    %471 = vmatmul.f32.gmra.mxu0 %v433
    %v472 = vpop.f32.mrf.mxu0
    %v473 = vadd.f32 %v345, %v472
    %474 = vdwg.mxu0
    %vm475 = vcmask 1040384
    %v476 = vsel %vm475, %v453, -inf
    %v477 = vsel %vm475, %v473, -inf
    %v478 = vmax.f32 %v476, %v477
    %479 = vmax.xlane.f32.xlu0 %v478
    %v480 = vpop.xlane.xlu0 %479
    %v481 = vsub.f32 %v453, %v480
    %v482 = vsub.f32 %v473, %v480
    %v483 = vmul.f32 %v481, 1.442695
    %v484 = vpow.pop %v483
    %v485 = vmul.f32 %v482, 1.442695
    %v486 = vpow.pop %v485
    %487 = vst [vmem:[#allocation1] ss:$2 sm:$0xff] %v79
    %v488 = vld.sshfl [vmem:[#allocation1] sm:$0xff pattern:$0x75316420]
    %v489 = vld.sshfl [vmem:[#allocation1 + $0x8] sm:$0xff pattern:$0x75316420]
    %492 = vmatpush.xpose.msra.mxu0 0.0
    %493 = vmatpush.xpose.msra.mxu0 0.0
    %494 = vmatpush.xpose.msra.mxu0 0.0
    %495 = vmatpush.xpose.msra.mxu0 0.0
    %496 = vmatpush.xpose.msra.mxu0 0.0
    %497 = vmatpush.xpose.msra.mxu0 0.0
    %498 = vmatpush.xpose.msra.mxu0 0.0
    %499 = vmatpush.xpose.msra.mxu0 0.0
    %500 = vmatpush.xpose.msra.mxu0 0.0
    %501 = vmatpush.xpose.msra.mxu0 0.0
    %502 = vmatpush.xpose.msra.mxu0 0.0
    %503 = vmatpush.xpose.msra.mxu0 0.0
    %504 = vmatpush.xpose.msra.mxu0 0.0
    %505 = vmatpush.xpose.msra.mxu0 0.0
    %506 = vmatpush.xpose.msra.mxu0 0.0
    %507 = vmatpush.xpose.msra.mxu0 %v488
    %508 = vmatmul.f32.gmra.mxu0 %v484
    %v509 = vpop.f32.mrf.mxu0
    %v510 = vadd.f32 0.0, %v509
    %511 = vdwg.mxu0
    %512 = vmatpush.xpose.msra.mxu0 0.0
    %513 = vmatpush.xpose.msra.mxu0 0.0
    %514 = vmatpush.xpose.msra.mxu0 0.0
    %515 = vmatpush.xpose.msra.mxu0 0.0
    %516 = vmatpush.xpose.msra.mxu0 0.0
    %517 = vmatpush.xpose.msra.mxu0 0.0
    %518 = vmatpush.xpose.msra.mxu0 0.0
    %519 = vmatpush.xpose.msra.mxu0 0.0
    %520 = vmatpush.xpose.msra.mxu0 0.0
    %521 = vmatpush.xpose.msra.mxu0 0.0
    %522 = vmatpush.xpose.msra.mxu0 0.0
    %523 = vmatpush.xpose.msra.mxu0 0.0
    %524 = vmatpush.xpose.msra.mxu0 0.0
    %525 = vmatpush.xpose.msra.mxu0 0.0
    %526 = vmatpush.xpose.msra.mxu0 0.0
    %527 = vmatpush.xpose.msra.mxu0 %v489
    %528 = vmatmul.f32.gmra.mxu0 %v486
    %v529 = vpop.f32.mrf.mxu0
    %v530 = vadd.f32 %v510, %v529
    %531 = vdwg.mxu0
    %532 = vst [vmem:[#allocation1] ss:$2 sm:$0xff] %v80
    %v533 = vld.sshfl [vmem:[#allocation1] sm:$0xff pattern:$0x75316420]
    %v534 = vld.sshfl [vmem:[#allocation1 + $0x8] sm:$0xff pattern:$0x75316420]
    %v535 = vsel %vm94, %v533, 0
    %v537 = vsel %vm94, %v534, 0
    %539 = vmatpush.msra.mxu0 0.0
    %540 = vmatpush.msra.mxu0 0.0
    %541 = vmatpush.msra.mxu0 0.0
    %542 = vmatpush.msra.mxu0 0.0
    %543 = vmatpush.msra.mxu0 0.0
    %544 = vmatpush.msra.mxu0 0.0
    %545 = vmatpush.msra.mxu0 0.0
    %546 = vmatpush.msra.mxu0 0.0
    %547 = vmatpush.msra.mxu0 0.0
    %548 = vmatpush.msra.mxu0 0.0
    %549 = vmatpush.msra.mxu0 0.0
    %550 = vmatpush.msra.mxu0 0.0
    %551 = vmatpush.msra.mxu0 0.0
    %552 = vmatpush.msra.mxu0 0.0
    %553 = vmatpush.msra.mxu0 0.0
    %554 = vmatpush.msra.mxu0 %v535
    %555 = vmatmul.f32.gmra.mxu0 %v350
    %v556 = vpop.f32.mrf.mxu0
    %v557 = vadd.f32 0.0, %v556
    %558 = vmatmul.f32.gmra.mxu0 %v353
    %v559 = vpop.f32.mrf.mxu0
    %v560 = vadd.f32 0.0, %v559
    %561 = vmatmul.f32.gmra.mxu0 %v356
    %v562 = vpop.f32.mrf.mxu0
    %v563 = vadd.f32 0.0, %v562
    %564 = vmatmul.f32.gmra.mxu0 %v359
    %v565 = vpop.f32.mrf.mxu0
    %v566 = vadd.f32 0.0, %v565
    %567 = vdwg.mxu0
    %568 = vmatpush.msra.mxu0 0.0
    %569 = vmatpush.msra.mxu0 0.0
    %570 = vmatpush.msra.mxu0 0.0
    %571 = vmatpush.msra.mxu0 0.0
    %572 = vmatpush.msra.mxu0 0.0
    %573 = vmatpush.msra.mxu0 0.0
    %574 = vmatpush.msra.mxu0 0.0
    %575 = vmatpush.msra.mxu0 0.0
    %576 = vmatpush.msra.mxu0 0.0
    %577 = vmatpush.msra.mxu0 0.0
    %578 = vmatpush.msra.mxu0 0.0
    %579 = vmatpush.msra.mxu0 0.0
    %580 = vmatpush.msra.mxu0 0.0
    %581 = vmatpush.msra.mxu0 0.0
    %582 = vmatpush.msra.mxu0 0.0
    %583 = vmatpush.msra.mxu0 %v537
    %584 = vmatmul.f32.gmra.mxu0 %v350
    %v585 = vpop.f32.mrf.mxu0
    %v586 = vadd.f32 0.0, %v585
    %587 = vmatmul.f32.gmra.mxu0 %v353
    %v588 = vpop.f32.mrf.mxu0
    %v589 = vadd.f32 0.0, %v588
    %590 = vmatmul.f32.gmra.mxu0 %v356
    %v591 = vpop.f32.mrf.mxu0
    %v592 = vadd.f32 0.0, %v591
    %593 = vmatmul.f32.gmra.mxu0 %v359
    %v594 = vpop.f32.mrf.mxu0
    %v595 = vadd.f32 0.0, %v594
    %596 = vdwg.mxu0
    %v597 = vmax.f32 %v557, 0.0
    %v598 = vmax.f32 %v586, 0.0
    %v599 = vmax.f32 %v560, 0.0
    %v600 = vmax.f32 %v589, 0.0
    %v601 = vmax.f32 %v563, 0.0
    %v602 = vmax.f32 %v592, 0.0
    %v603 = vmax.f32 %v566, 0.0
    %v604 = vmax.f32 %v595, 0.0
    %v605 = vrot.slane %v431, 1
    %v606 = vsel %vm284, %v605, 0
    %608 = vmatpush.msra.mxu0 0.0
    %609 = vmatpush.msra.mxu0 0.0
    %610 = vmatpush.msra.mxu0 0.0
    %611 = vmatpush.msra.mxu0 0.0
    %612 = vmatpush.msra.mxu0 0.0
    %613 = vmatpush.msra.mxu0 0.0
    %614 = vmatpush.msra.mxu0 0.0
    %615 = vmatpush.msra.mxu0 0.0
    %616 = vmatpush.msra.mxu0 0.0
    %617 = vmatpush.msra.mxu0 0.0
    %618 = vmatpush.msra.mxu0 0.0
    %619 = vmatpush.msra.mxu0 0.0
    %620 = vmatpush.msra.mxu0 %v603
    %621 = vmatpush.msra.mxu0 %v601
    %622 = vmatpush.msra.mxu0 %v599
    %623 = vmatpush.msra.mxu0 %v597
    %624 = vmatmul.f32.gmra.mxu0 %v606
    %v625 = vpop.f32.mrf.mxu0
    %v626 = vadd.f32 %v345, %v625
    %627 = vdwg.mxu0
    %628 = vmatpush.msra.mxu0 0.0
    %629 = vmatpush.msra.mxu0 0.0
    %630 = vmatpush.msra.mxu0 0.0
    %631 = vmatpush.msra.mxu0 0.0
    %632 = vmatpush.msra.mxu0 0.0
    %633 = vmatpush.msra.mxu0 0.0
    %634 = vmatpush.msra.mxu0 0.0
    %635 = vmatpush.msra.mxu0 0.0
    %636 = vmatpush.msra.mxu0 0.0
    %637 = vmatpush.msra.mxu0 0.0
    %638 = vmatpush.msra.mxu0 0.0
    %639 = vmatpush.msra.mxu0 0.0
    %640 = vmatpush.msra.mxu0 %v604
    %641 = vmatpush.msra.mxu0 %v602
    %642 = vmatpush.msra.mxu0 %v600
    %643 = vmatpush.msra.mxu0 %v598
    %644 = vmatmul.f32.gmra.mxu0 %v606
    %v645 = vpop.f32.mrf.mxu0
    %v646 = vadd.f32 %v345, %v645
    %647 = vdwg.mxu0
    %v648 = vsel %vm475, %v626, -inf
    %v649 = vsel %vm475, %v646, -inf
    %v650 = vmax.f32 %v648, %v649
    %651 = vmax.xlane.f32.xlu0 %v650
    %v652 = vpop.xlane.xlu0 %651
    %v653 = vsub.f32 %v626, %v652
    %v654 = vsub.f32 %v646, %v652
    %v655 = vmul.f32 %v653, 1.442695
    %v656 = vpow.pop %v655
    %v657 = vmul.f32 %v654, 1.442695
    %v658 = vpow.pop %v657
    %659 = vst [vmem:[#allocation1] ss:$2 sm:$0xff] %v80
    %v660 = vld.sshfl [vmem:[#allocation1] sm:$0xff pattern:$0x75316420]
    %v661 = vld.sshfl [vmem:[#allocation1 + $0x8] sm:$0xff pattern:$0x75316420]
    %664 = vmatpush.xpose.msra.mxu0 0.0
    %665 = vmatpush.xpose.msra.mxu0 0.0
    %666 = vmatpush.xpose.msra.mxu0 0.0
    %667 = vmatpush.xpose.msra.mxu0 0.0
    %668 = vmatpush.xpose.msra.mxu0 0.0
    %669 = vmatpush.xpose.msra.mxu0 0.0
    %670 = vmatpush.xpose.msra.mxu0 0.0
    %671 = vmatpush.xpose.msra.mxu0 0.0
    %672 = vmatpush.xpose.msra.mxu0 0.0
    %673 = vmatpush.xpose.msra.mxu0 0.0
    %674 = vmatpush.xpose.msra.mxu0 0.0
    %675 = vmatpush.xpose.msra.mxu0 0.0
    %676 = vmatpush.xpose.msra.mxu0 0.0
    %677 = vmatpush.xpose.msra.mxu0 0.0
    %678 = vmatpush.xpose.msra.mxu0 0.0
    %679 = vmatpush.xpose.msra.mxu0 %v660
    %680 = vmatmul.f32.gmra.mxu0 %v656
    %v681 = vpop.f32.mrf.mxu0
    %v682 = vadd.f32 0.0, %v681
    %683 = vdwg.mxu0
    %684 = vmatpush.xpose.msra.mxu0 0.0
    %685 = vmatpush.xpose.msra.mxu0 0.0
    %686 = vmatpush.xpose.msra.mxu0 0.0
    %687 = vmatpush.xpose.msra.mxu0 0.0
    %688 = vmatpush.xpose.msra.mxu0 0.0
    %689 = vmatpush.xpose.msra.mxu0 0.0
    %690 = vmatpush.xpose.msra.mxu0 0.0
    %691 = vmatpush.xpose.msra.mxu0 0.0
    %692 = vmatpush.xpose.msra.mxu0 0.0
    %693 = vmatpush.xpose.msra.mxu0 0.0
    %694 = vmatpush.xpose.msra.mxu0 0.0
    %695 = vmatpush.xpose.msra.mxu0 0.0
    %696 = vmatpush.xpose.msra.mxu0 0.0
    %697 = vmatpush.xpose.msra.mxu0 0.0
    %698 = vmatpush.xpose.msra.mxu0 0.0
    %699 = vmatpush.xpose.msra.mxu0 %v661
    %700 = vmatmul.f32.gmra.mxu0 %v658
    %v701 = vpop.f32.mrf.mxu0
    %v702 = vadd.f32 %v682, %v701
    %703 = vdwg.mxu0
    %v705 = vrot.slane %v702, 7
    %v707 = vsel %vm475, %v530, %v705
    %709 = vset.pattern.permute.xlu0 3
    %710 = vperm.xlu0 %709, %v707
    %v711 = vpop.permute.xlu0 %710
    %v713 = vrcp.pop %v711
    %v714 = vmul.f32 %v711, %v713
    %v715 = vsub.f32 1.0, %v714
    %v716 = vmul.f32 %v713, %v715
    %v717 = vadd.f32 %v713, %v716
    %vm718 = vweird.f32 %v711
    %vm719 = vweird.f32 %v713
    %vm720 = vmor %vm718, %vm719
    %v721 = vsel %vm720, %v713, %v717
    %v722 = vand.u32 2147483647, %v711
    %vm723 = vcmp.eq.f32.partialorder %v722, 8.507059e+37
    %v724 = vand.u32 %v711, 2147483648
    %v725 = vor.u32 1.1754944e-38, %v724
    %v726 = vsel %vm723, %v725, %v721
    %v727 = vmul.f32 %v707, %v726
    %v728 = vld [vmem:[#allocation5 + $0x28] sm:$0xf]
    %v730 = vsel %vm123, %v727, 0
    %v733 = vsel %vm94, %v728, 0
    %735 = vmatpush.msra.mxu0 0.0
    %736 = vmatpush.msra.mxu0 0.0
    %737 = vmatpush.msra.mxu0 0.0
    %738 = vmatpush.msra.mxu0 0.0
    %739 = vmatpush.msra.mxu0 0.0
    %740 = vmatpush.msra.mxu0 0.0
    %741 = vmatpush.msra.mxu0 0.0
    %742 = vmatpush.msra.mxu0 0.0
    %743 = vmatpush.msra.mxu0 0.0
    %744 = vmatpush.msra.mxu0 0.0
    %745 = vmatpush.msra.mxu0 0.0
    %746 = vmatpush.msra.mxu0 0.0
    %747 = vmatpush.msra.mxu0 0.0
    %748 = vmatpush.msra.mxu0 0.0
    %749 = vmatpush.msra.mxu0 0.0
    %750 = vmatpush.msra.mxu0 %v733
    %751 = vmatmul.f32.gmra.mxu0 %v730
    %v752 = vpop.f32.mrf.mxu0
    %v753 = vadd.f32 0.0, %v752
    %754 = vdwg.mxu0
    %v755 = vld [vmem:[#allocation5 + $0x30] sm:$0xff]
    %v756 = vld [vmem:[#allocation5 + $0x78] sm:$0xff]
    %v757 = vld [vmem:[#allocation5 + $0xc0] sm:$0xff]
    %v758 = vld [vmem:[#allocation5 + $0x108] sm:$0xff]
    %v759 = vld [vmem:[#allocation8 + $0x3] sm:$0x1]
    %v761 = vperm.slane %v759, 0
    %v764 = vsel %vm284, %v753, 0
    %766 = vmatpush.msra.mxu0 0.0
    %767 = vmatpush.msra.mxu0 0.0
    %768 = vmatpush.msra.mxu0 0.0
    %769 = vmatpush.msra.mxu0 0.0
    %770 = vmatpush.msra.mxu0 0.0
    %771 = vmatpush.msra.mxu0 0.0
    %772 = vmatpush.msra.mxu0 0.0
    %773 = vmatpush.msra.mxu0 0.0
    %774 = vmatpush.msra.mxu0 0.0
    %775 = vmatpush.msra.mxu0 0.0
    %776 = vmatpush.msra.mxu0 0.0
    %777 = vmatpush.msra.mxu0 0.0
    %778 = vmatpush.msra.mxu0 %v758
    %779 = vmatpush.msra.mxu0 %v757
    %780 = vmatpush.msra.mxu0 %v756
    %781 = vmatpush.msra.mxu0 %v755
    %782 = vmatmul.f32.gmra.mxu0 %v764
    %v783 = vpop.f32.mrf.mxu0
    %v784 = vadd.f32 %v761, %v783
    %785 = vdwg.mxu0
    %v786 = vmax.f32 %v784, 0.0
    %788 = vrot.lane.b32.xlu0 %v786, 32
    %v789 = vpop.permute.xlu0 %788
    %v791 = vmul.f32 %v308, %v789
    %793 = vrot.lane.b32.xlu0 %v333, 32
    %v794 = vpop.permute.xlu0 %793
    %v796 = vadd.f32 %v791, %v794
    %v797 = vld [vmem:[#allocation5 + $0x38] sm:$0xff]
    %v798 = vld [vmem:[#allocation5 + $0x80] sm:$0xff]
    %v799 = vld [vmem:[#allocation5 + $0xc8] sm:$0xff]
    %v800 = vld [vmem:[#allocation5 + $0x110] sm:$0xff]
    %v801 = vld [vmem:[#allocation8 + $0x4] sm:$0x1]
    %v803 = vperm.slane %v801, 0
    %806 = vrot.lane.b32.xlu0 %v796, 96
    %v807 = vpop.permute.xlu0 %806
    %v808 = vsel %vm284, %v807, 0
    %810 = vmatpush.msra.mxu0 0.0
    %811 = vmatpush.msra.mxu0 0.0
    %812 = vmatpush.msra.mxu0 0.0
    %813 = vmatpush.msra.mxu0 0.0
    %814 = vmatpush.msra.mxu0 0.0
    %815 = vmatpush.msra.mxu0 0.0
    %816 = vmatpush.msra.mxu0 0.0
    %817 = vmatpush.msra.mxu0 0.0
    %818 = vmatpush.msra.mxu0 0.0
    %819 = vmatpush.msra.mxu0 0.0
    %820 = vmatpush.msra.mxu0 0.0
    %821 = vmatpush.msra.mxu0 0.0
    %822 = vmatpush.msra.mxu0 %v800
    %823 = vmatpush.msra.mxu0 %v799
    %824 = vmatpush.msra.mxu0 %v798
    %825 = vmatpush.msra.mxu0 %v797
    %826 = vmatmul.f32.gmra.mxu0 %v808
    %v827 = vpop.f32.mrf.mxu0
    %v828 = vadd.f32 %v803, %v827
    %829 = vdwg.mxu0
    %v830 = vmax.f32 %v828, 0.0
    %v831 = vld [vmem:[#allocation5 + $0x40] sm:$0xff]
    %v832 = vld [vmem:[#allocation5 + $0x88] sm:$0xff]
    %v833 = vld [vmem:[#allocation5 + $0xd0] sm:$0xff]
    %v834 = vld [vmem:[#allocation5 + $0x118] sm:$0xff]
    %v835 = vld [vmem:[#allocation8 + $0x5] sm:$0x1]
    %v837 = vperm.slane %v835, 0
    %v840 = vsel %vm284, %v830, 0
    %842 = vmatpush.msra.mxu0 0.0
    %843 = vmatpush.msra.mxu0 0.0
    %844 = vmatpush.msra.mxu0 0.0
    %845 = vmatpush.msra.mxu0 0.0
    %846 = vmatpush.msra.mxu0 0.0
    %847 = vmatpush.msra.mxu0 0.0
    %848 = vmatpush.msra.mxu0 0.0
    %849 = vmatpush.msra.mxu0 0.0
    %850 = vmatpush.msra.mxu0 0.0
    %851 = vmatpush.msra.mxu0 0.0
    %852 = vmatpush.msra.mxu0 0.0
    %853 = vmatpush.msra.mxu0 0.0
    %854 = vmatpush.msra.mxu0 %v834
    %855 = vmatpush.msra.mxu0 %v833
    %856 = vmatpush.msra.mxu0 %v832
    %857 = vmatpush.msra.mxu0 %v831
    %858 = vmatmul.f32.gmra.mxu0 %v840
    %v859 = vpop.f32.mrf.mxu0
    %v860 = vadd.f32 %v837, %v859
    %861 = vdwg.mxu0
    %vm862 = vcmask 91136
    %863 = vst.msk [vmem:[#allocation10] sm:$0x3] %vm862, %v860
    // Predicated region
    $region34: #{tpu_custom_call.1} parent=1 // pred_check
      _
    $region35: #{tpu_custom_call.1} parent=1 // pred_check_branch
      %865 = sbr.rel (0) target = $region37
    $region36: #{tpu_custom_call.1} parent=1 // pred_region
      %867 = vsyncadd [#allocation4], 0
      %s869 = sshll.u32 [#allocation10], 4
      %s870 = int_to_ptr.vmem [resolvable:$true] %s869
      %s871 = sshll.u32 %s4, 4
      %s872 = int_to_ptr.hbm [resolvable:$true] %s871
      %874 = dma.vmem_to_hbm [thread:$0]  %s870, 32, %s872, [#allocation4]
    $region37: #{tpu_custom_call.1} parent=1 // pred_fallthru
      _
    // Predicated region
    $region38: #{tpu_custom_call.1} parent=1 // pred_check
      _
    $region39: #{tpu_custom_call.1} parent=1 // pred_check_branch
      %876 = sbr.rel (0) target = $region41
    $region40: #{tpu_custom_call.1} parent=1 // pred_region
      %878 = dma.done [#allocation4], 32
    $region41: #{tpu_custom_call.1} parent=1 // pred_fallthru
      _
    %879 = vsyncpa [#allocation3], 1
    %880 = vsyncpa [#allocation6], 1
    %881 = vsyncpa [#allocation9], 1
    %882 = vsyncpa [#allocation4], 1

</llo_original>
